<compile_context>
chip_gen: v7x
topology: tpu7x:2x2x1
jax: 0.10.0
libtpu: 0.0.40
codegen_flags: <defaults>
</compile_context>

<pallas_src>
import functools

import jax
import jax.numpy as jnp
from jax import lax
from jax.experimental import pallas as pl
from jax.experimental.pallas import tpu as pltpu

_VMEM_LIMIT_BYTES = 32 * 1024 * 1024       # <= scoped-VMEM ceiling on v5e/v6e/v7x
_DEFAULT_FUSED_SLAB_BYTES = 4 * 1024 * 1024  # per-image slab budget for fused path
_DEFAULT_BLOCK_BYTES = 2 * 1024 * 1024       # per-block budget for tiled path
_MAX_HW_TILE = 16384                         # caps per-tile chunk unroll at 128


def _gate_from_pooled(pooled, w1, w2):
    """pooled: (C, 2) f32 with columns [avg, max]; w1: (Cmid, C); w2: (C, Cmid).

    Returns the sigmoid gate (C, 1) f32:  sigmoid(w2@relu(w1@avg) + w2@relu(w1@max)).
    """
    h = jnp.maximum(jnp.dot(w1, pooled, preferred_element_type=jnp.float32), 0.0)
    o2 = jnp.dot(w2, h, preferred_element_type=jnp.float32)       # (C, 2)
    return jax.nn.sigmoid(o2[:, 0:1] + o2[:, 1:2])                # (C, 1)


# ----------------------------------------------------------------------------
# Fused single-pass kernel: pooled stats + gate MLP + recalibration per block.
# ----------------------------------------------------------------------------
def _fused_kernel(x_ref, w1_ref, w2_ref, o_ref, *, inv_hw):
    w1 = w1_ref[...].astype(jnp.float32)
    w2 = w2_ref[...].astype(jnp.float32)
    for b in range(x_ref.shape[0]):                    # static unroll over batch block
        xb = x_ref[b]                                  # (C, HW), native dtype
        s = jnp.sum(xb, axis=-1, keepdims=True, dtype=jnp.float32)    # (C, 1)
        m = jnp.max(xb, axis=-1, keepdims=True).astype(jnp.float32)   # (C, 1)
        pooled = jnp.concatenate([s * inv_hw, m], axis=1)             # (C, 2)
        gate = _gate_from_pooled(pooled, w1, w2)                      # (C, 1) f32
        o_ref[b] = (xb * gate).astype(o_ref.dtype)     # f32 gate applied pre-downcast


# ----------------------------------------------------------------------------
# Two-pass path, pass 1: reduce over HW tiles + per-image gate in the finalize.
# ----------------------------------------------------------------------------
def _reduce_gate_kernel(x_ref, w1_ref, w2_ref, attn_ref, sum_sc, max_sc,
                        *, hw_true, hw_tile):
    k = pl.program_id(1)
    n_k = pl.num_programs(1)
    n_chunks = hw_tile // 128

    @pl.when(k == 0)
    def _init():
        sum_sc[...] = jnp.zeros(sum_sc.shape, sum_sc.dtype)
        max_sc[...] = jnp.full(max_sc.shape, -jnp.inf, max_sc.dtype)

    def accumulate(masked):
        # Lane-dense (C, 128) accumulators; pure VPU adds per chunk — the single
        # cross-lane reduce happens only in the finalize below.
        acc_s = sum_sc[...]
        acc_m = max_sc[...]
        base = k * hw_tile
        for j in range(n_chunks):                                   # static unroll
            cf = x_ref[0, :, j * 128:(j + 1) * 128].astype(jnp.float32)  # (C, 128)
            if masked:
                pos = base + j * 128 + lax.broadcasted_iota(jnp.int32, cf.shape, 1)
                valid = pos < hw_true
                acc_s = acc_s + jnp.where(valid, cf, 0.0)
                acc_m = jnp.maximum(acc_m, jnp.where(valid, cf, -jnp.inf))
            else:
                acc_s = acc_s + cf
                acc_m = jnp.maximum(acc_m, cf)
        sum_sc[...] = acc_s
        max_sc[...] = acc_m

    if hw_true % hw_tile != 0:
        # Only the final (ragged) tile pays the iota/compare/select masking cost.
        @pl.when(k < n_k - 1)
        def _interior():
            accumulate(masked=False)

        @pl.when(k == n_k - 1)
        def _tail():
            accumulate(masked=True)
    else:
        accumulate(masked=False)

    # Finalize once per image: cross-lane reduce + tiny shared MLP + sigmoid.
    @pl.when(k == n_k - 1)
    def _finalize():
        avg = jnp.sum(sum_sc[...], axis=-1, keepdims=True) * (1.0 / hw_true)  # (C, 1)
        mx = jnp.max(max_sc[...], axis=-1, keepdims=True)                     # (C, 1)
        pooled = jnp.concatenate([avg, mx], axis=1)                           # (C, 2)
        w1 = w1_ref[...].astype(jnp.float32)
        w2 = w2_ref[...].astype(jnp.float32)
        attn_ref[0] = _gate_from_pooled(pooled, w1, w2)                       # (C, 1)


# ----------------------------------------------------------------------------
# Two-pass path, pass 2: stream x and scale by the precomputed f32 gate.
# ----------------------------------------------------------------------------
def _apply_kernel(x_ref, attn_ref, o_ref):
    gate = attn_ref[0]                                   # (C, 1) float32
    o_ref[0] = (x_ref[0] * gate).astype(o_ref.dtype)     # f32 multiply, then downcast


def channel_attention(x, w1, w2, *, hw_tile=None,
                      max_fused_bytes=_DEFAULT_FUSED_SLAB_BYTES,
                      block_bytes=_DEFAULT_BLOCK_BYTES,
                      donate=False):
    """ChannelAttention forward.

    x: [B, C, H, W]; w1: [C//r, C]; w2: [C, C//r] (1x1 conv weights, squeezed).
    hw_tile: force the two-pass tiled path with this HW tile (rounded to 128).
    donate: alias x -> output (use when the caller donates x).
    """
    B, C, H, W = x.shape
    Cmid = w1.shape[0]
    HW = H * W
    dsize = jnp.dtype(x.dtype).itemsize
    xf = x.reshape(B, C, HW)
    slab_bytes = C * HW * dsize
    io_aliases = {0: 0} if donate else {}

    # ------------------------- Fused single-pass path -------------------------
    if hw_tile is None and slab_bytes <= max_fused_bytes:
        bblk = max(1, min(B, max_fused_bytes // max(slab_bytes, 1)))
        while B % bblk:                      # largest divisor of B (keeps blocks exact)
            bblk -= 1
        fused = functools.partial(_fused_kernel, inv_hw=1.0 / HW)
        out = pl.pallas_call(
            fused,
            out_shape=jax.ShapeDtypeStruct((B, C, HW), x.dtype),
            grid_spec=pltpu.PrefetchScalarGridSpec(
                num_scalar_prefetch=0,
                grid=(B // bblk,),
                in_specs=[
                    pl.BlockSpec((bblk, C, HW), lambda i: (i, 0, 0)),
                    pl.BlockSpec((Cmid, C), lambda i: (0, 0)),
                    pl.BlockSpec((C, Cmid), lambda i: (0, 0)),
                ],
                out_specs=pl.BlockSpec((bblk, C, HW), lambda i: (i, 0, 0)),
            ),
            compiler_params=pltpu.CompilerParams(
                dimension_semantics=("parallel",),
                vmem_limit_bytes=_VMEM_LIMIT_BYTES),
            input_output_aliases=io_aliases,
        )(xf, w1, w2)
        return out.reshape(B, C, H, W)

    # --------------------------- Two-pass tiled path --------------------------
    hw_round = ((HW + 127) // 128) * 128
    if hw_tile is None:
        hw_tile = max(128, (block_bytes // max(C * dsize, 1)) // 128 * 128)
    else:
        hw_tile = ((hw_tile + 127) // 128) * 128
    hw_tile = max(128, min(hw_tile, _MAX_HW_TILE, hw_round))
    n_hw = pl.cdiv(HW, hw_tile)

    # ---- Pass 1: pooled stats + gate, (B, C, 1) f32 ----
    reduce_kernel = functools.partial(_reduce_gate_kernel,
                                      hw_true=HW, hw_tile=hw_tile)
    attn = pl.pallas_call(
        reduce_kernel,
        out_shape=jax.ShapeDtypeStruct((B, C, 1), jnp.float32),
        grid_spec=pltpu.PrefetchScalarGridSpec(
            num_scalar_prefetch=0,
            grid=(B, n_hw),
            in_specs=[
                pl.BlockSpec((1, C, hw_tile), lambda b, k: (b, 0, k)),
                pl.BlockSpec((Cmid, C), lambda b, k: (0, 0)),
                pl.BlockSpec((C, Cmid), lambda b, k: (0, 0)),
            ],
            out_specs=pl.BlockSpec((1, C, 1), lambda b, k: (b, 0, 0)),
            scratch_shapes=[pltpu.VMEM((C, 128), jnp.float32),   # running sum (lane-dense)
                            pltpu.VMEM((C, 128), jnp.float32)],  # running max (lane-dense)
        ),
        compiler_params=pltpu.CompilerParams(
            dimension_semantics=("parallel", "arbitrary"),
            vmem_limit_bytes=_VMEM_LIMIT_BYTES),
    )(xf, w1, w2)

    # ---- Pass 2: recalibrate, fully parallel grid, no wrapper pad/slice ----
    out = pl.pallas_call(
        _apply_kernel,
        out_shape=jax.ShapeDtypeStruct((B, C, HW), x.dtype),
        grid_spec=pltpu.PrefetchScalarGridSpec(
            num_scalar_prefetch=0,
            grid=(B, n_hw),
            in_specs=[
                pl.BlockSpec((1, C, hw_tile), lambda b, k: (b, 0, k)),
                pl.BlockSpec((1, C, 1), lambda b, k: (b, 0, 0)),
            ],
            out_specs=pl.BlockSpec((1, C, hw_tile), lambda b, k: (b, 0, k)),
        ),
        compiler_params=pltpu.CompilerParams(
            dimension_semantics=("parallel", "parallel"),
            vmem_limit_bytes=_VMEM_LIMIT_BYTES),
        input_output_aliases=io_aliases,
    )(xf, attn)

    return out.reshape(B, C, H, W)


def channel_attention_ref(x, w1, w2):
    """Pure-JAX reference mirroring the PyTorch forward."""
    avg = jnp.mean(x, axis=(2, 3), keepdims=True)            # [B,C,1,1]
    mx = jnp.max(x, axis=(2, 3), keepdims=True)              # [B,C,1,1]

    def mlp(p):
        h = jnp.einsum("oc,bcij->boij", w1, p)                # conv1, 1x1, no bias
        h = jnp.maximum(h, 0.0)
        return jnp.einsum("oc,bcij->boij", w2, h)             # conv2, 1x1, no bias

    out = mlp(avg) + mlp(mx)
    return x * jax.nn.sigmoid(out)


if __name__ == "__main__":
    key = jax.random.PRNGKey(0)
    reduction = 16

    B, C, H, W = 2, 32, 16, 16
    Cmid = C // reduction
    kx, k1, k2, kx2 = jax.random.split(key, 4)
    x = jax.random.normal(kx, (B, C, H, W), dtype=jnp.float32)
    w1 = 0.1 * jax.random.normal(k1, (Cmid, C), dtype=jnp.float32)
    w2 = 0.1 * jax.random.normal(k2, (C, Cmid), dtype=jnp.float32)
    y_ref = channel_attention_ref(x, w1, w2)

    # Case 1: fused single-pass path (slab fits VMEM, batch-blocked grid of 1 step).
    y = jax.block_until_ready(channel_attention(x, w1, w2))
    assert y.shape == x.shape and y.dtype == x.dtype
    assert jnp.allclose(y, y_ref, atol=1e-5, rtol=1e-5), "mismatch (fused path)"

    # Case 2: two-pass path, exact tiles (HW=256, hw_tile=128 -> 2 tiles, no mask).
    y = jax.block_until_ready(channel_attention(x, w1, w2, hw_tile=128))
    assert jnp.allclose(y, y_ref, atol=1e-5, rtol=1e-5), "mismatch (two-pass exact)"

    # Case 3: two-pass path, ragged tail (27*27=729, hw_tile=256 -> 3 tiles, masked tail).
    x2 = jax.random.normal(kx2, (1, C, 27, 27), dtype=jnp.float32)
    y2 = jax.block_until_ready(channel_attention(x2, w1, w2, hw_tile=256))
    y2_ref = channel_attention_ref(x2, w1, w2)
    assert y2.shape == x2.shape and y2.dtype == x2.dtype
    assert jnp.allclose(y2, y2_ref, atol=1e-5, rtol=1e-5), "mismatch (two-pass ragged)"

    # Case 4: auto two-pass selection (fused path disabled) with budget-derived tile.
    y = jax.block_until_ready(channel_attention(x, w1, w2, max_fused_bytes=0))
    assert jnp.allclose(y, y_ref, atol=1e-5, rtol=1e-5), "mismatch (auto two-pass)"

    print("KERNEL_OK")
</pallas_src>

<mosaic_0001>
module attributes {stable_mosaic.version = 11 : i64} {
  func.func @_fused_kernel(%arg0: i32, %arg1: memref<2x32x256xf32, #tpu.memory_space<vmem>>, %arg2: memref<2x32xf32, #tpu.memory_space<vmem>>, %arg3: memref<32x2xf32, #tpu.memory_space<vmem>>, %arg4: memref<2x32x256xf32, #tpu.memory_space<vmem>>) attributes {dimension_semantics = [#tpu.dimension_semantics<parallel>], iteration_bounds = array<i64: 1>, scalar_prefetch = 0 : i64, scratch_operands = 0 : i64, tpu.core_type = #tpu.core_type<tc>, window_params = [{transform_indices = @transform_0, window_bounds = array<i64: 2, 32, 256>}, {pipeline_mode = #tpu.pipeline_mode<synchronous>, transform_indices = @transform_1, window_bounds = array<i64: 2, 32>}, {pipeline_mode = #tpu.pipeline_mode<synchronous>, transform_indices = @transform_2, window_bounds = array<i64: 32, 2>}, {transform_indices = @transform_3, window_bounds = array<i64: 2, 32, 256>}]} {
    %c0 = arith.constant 0 : index
    %c0_0 = arith.constant 0 : index
    %0 = vector.load %arg2[%c0, %c0_0] : memref<2x32xf32, #tpu.memory_space<vmem>>, vector<2x32xf32>
    %c0_1 = arith.constant 0 : index
    %c0_2 = arith.constant 0 : index
    %1 = vector.load %arg3[%c0_1, %c0_2] : memref<32x2xf32, #tpu.memory_space<vmem>>, vector<32x2xf32>
    %c0_3 = arith.constant 0 : index
    %c0_4 = arith.constant 0 : index
    %c0_5 = arith.constant 0 : index
    %2 = vector.load %arg1[%c0_3, %c0_4, %c0_5] : memref<2x32x256xf32, #tpu.memory_space<vmem>>, vector<1x32x256xf32>
    %3 = vector.shape_cast %2 : vector<1x32x256xf32> to vector<32x256xf32>
    %cst = arith.constant dense<0.000000e+00> : vector<32xf32>
    %4 = vector.multi_reduction <add>, %3, %cst [1] : vector<32x256xf32> to vector<32xf32>
    %5 = vector.shape_cast %4 : vector<32xf32> to vector<32x1xf32>
    %cst_6 = arith.constant dense<0xFF800000> : vector<32xf32>
    %6 = vector.multi_reduction <maximumf>, %3, %cst_6 [1] : vector<32x256xf32> to vector<32xf32>
    %7 = vector.shape_cast %6 : vector<32xf32> to vector<32x1xf32>
    %cst_7 = arith.constant 3.906250e-03 : f32
    %8 = vector.broadcast %cst_7 : f32 to vector<32x1xf32>
    %9 = arith.mulf %5, %8 : vector<32x1xf32>
    %10 = tpu.concatenate %9, %7 in 1 : vector<32x1xf32>, vector<32x1xf32> -> vector<32x2xf32>
    %cst_8 = arith.constant dense<0.000000e+00> : vector<2x2xf32>
    %11 = tpu.matmul %0, %10, %cst_8 {dimension_numbers = #tpu.dot_dimension_numbers<[1], [0], [0], [1], [0, 0, 1, 1], [], []>} : vector<2x32xf32>, vector<32x2xf32>, vector<2x2xf32> -> vector<2x2xf32>
    %cst_9 = arith.constant 0.000000e+00 : f32
    %12 = vector.broadcast %cst_9 : f32 to vector<2x2xf32>
    %13 = arith.maximumf %11, %12 : vector<2x2xf32>
    %cst_10 = arith.constant dense<0.000000e+00> : vector<32x2xf32>
    %14 = tpu.matmul %1, %13, %cst_10 {dimension_numbers = #tpu.dot_dimension_numbers<[1], [0], [0], [1], [0, 0, 1, 1], [], []>} : vector<32x2xf32>, vector<2x2xf32>, vector<32x2xf32> -> vector<32x2xf32>
    %15 = vector.extract_strided_slice %14 {offsets = [0, 0], sizes = [32, 1], strides = [1, 1]} : vector<32x2xf32> to vector<32x1xf32>
    %16 = vector.extract_strided_slice %14 {offsets = [0, 1], sizes = [32, 1], strides = [1, 1]} : vector<32x2xf32> to vector<32x1xf32>
    %17 = arith.addf %15, %16 : vector<32x1xf32>
    %18 = arith.negf %17 : vector<32x1xf32>
    %19 = math.exp %18 : vector<32x1xf32>
    %cst_11 = arith.constant 1.000000e+00 : f32
    %20 = vector.broadcast %cst_11 : f32 to vector<32x1xf32>
    %21 = arith.addf %20, %19 : vector<32x1xf32>
    %22 = arith.divf %20, %21 : vector<32x1xf32>
    %23 = vector.broadcast %22 : vector<32x1xf32> to vector<32x256xf32>
    %24 = arith.mulf %3, %23 : vector<32x256xf32>
    %c0_12 = arith.constant 0 : index
    %c0_13 = arith.constant 0 : index
    %c0_14 = arith.constant 0 : index
    %25 = vector.load %arg4[%c0_12, %c0_13, %c0_14] : memref<2x32x256xf32, #tpu.memory_space<vmem>>, vector<1x32x256xf32>
    %26 = vector.shape_cast %25 : vector<1x32x256xf32> to vector<32x256xf32>
    %27 = vector.shape_cast %24 : vector<32x256xf32> to vector<1x32x256xf32>
    tpu.vector_store %arg4[%c0_12, %c0_13, %c0_14], %27 {strides = array<i32>} : memref<2x32x256xf32, #tpu.memory_space<vmem>>, vector<1x32x256xf32>,
    %c1 = arith.constant 1 : index
    %c0_15 = arith.constant 0 : index
    %c0_16 = arith.constant 0 : index
    %28 = vector.load %arg1[%c1, %c0_15, %c0_16] : memref<2x32x256xf32, #tpu.memory_space<vmem>>, vector<1x32x256xf32>
    %29 = vector.shape_cast %28 : vector<1x32x256xf32> to vector<32x256xf32>
    %cst_17 = arith.constant dense<0.000000e+00> : vector<32xf32>
    %30 = vector.multi_reduction <add>, %29, %cst_17 [1] : vector<32x256xf32> to vector<32xf32>
    %31 = vector.shape_cast %30 : vector<32xf32> to vector<32x1xf32>
    %cst_18 = arith.constant dense<0xFF800000> : vector<32xf32>
    %32 = vector.multi_reduction <maximumf>, %29, %cst_18 [1] : vector<32x256xf32> to vector<32xf32>
    %33 = vector.shape_cast %32 : vector<32xf32> to vector<32x1xf32>
    %cst_19 = arith.constant 3.906250e-03 : f32
    %34 = vector.broadcast %cst_19 : f32 to vector<32x1xf32>
    %35 = arith.mulf %31, %34 : vector<32x1xf32>
    %36 = tpu.concatenate %35, %33 in 1 : vector<32x1xf32>, vector<32x1xf32> -> vector<32x2xf32>
    %cst_20 = arith.constant dense<0.000000e+00> : vector<2x2xf32>
    %37 = tpu.matmul %0, %36, %cst_20 {dimension_numbers = #tpu.dot_dimension_numbers<[1], [0], [0], [1], [0, 0, 1, 1], [], []>} : vector<2x32xf32>, vector<32x2xf32>, vector<2x2xf32> -> vector<2x2xf32>
    %cst_21 = arith.constant 0.000000e+00 : f32
    %38 = vector.broadcast %cst_21 : f32 to vector<2x2xf32>
    %39 = arith.maximumf %37, %38 : vector<2x2xf32>
    %cst_22 = arith.constant dense<0.000000e+00> : vector<32x2xf32>
    %40 = tpu.matmul %1, %39, %cst_22 {dimension_numbers = #tpu.dot_dimension_numbers<[1], [0], [0], [1], [0, 0, 1, 1], [], []>} : vector<32x2xf32>, vector<2x2xf32>, vector<32x2xf32> -> vector<32x2xf32>
    %41 = vector.extract_strided_slice %40 {offsets = [0, 0], sizes = [32, 1], strides = [1, 1]} : vector<32x2xf32> to vector<32x1xf32>
    %42 = vector.extract_strided_slice %40 {offsets = [0, 1], sizes = [32, 1], strides = [1, 1]} : vector<32x2xf32> to vector<32x1xf32>
    %43 = arith.addf %41, %42 : vector<32x1xf32>
    %44 = arith.negf %43 : vector<32x1xf32>
    %45 = math.exp %44 : vector<32x1xf32>
    %cst_23 = arith.constant 1.000000e+00 : f32
    %46 = vector.broadcast %cst_23 : f32 to vector<32x1xf32>
    %47 = arith.addf %46, %45 : vector<32x1xf32>
    %48 = arith.divf %46, %47 : vector<32x1xf32>
    %49 = vector.broadcast %48 : vector<32x1xf32> to vector<32x256xf32>
    %50 = arith.mulf %29, %49 : vector<32x256xf32>
    %c1_24 = arith.constant 1 : index
    %c0_25 = arith.constant 0 : index
    %c0_26 = arith.constant 0 : index
    %51 = vector.load %arg4[%c1_24, %c0_25, %c0_26] : memref<2x32x256xf32, #tpu.memory_space<vmem>>, vector<1x32x256xf32>
    %52 = vector.shape_cast %51 : vector<1x32x256xf32> to vector<32x256xf32>
    %53 = vector.shape_cast %50 : vector<32x256xf32> to vector<1x32x256xf32>
    tpu.vector_store %arg4[%c1_24, %c0_25, %c0_26], %53 {strides = array<i32>} : memref<2x32x256xf32, #tpu.memory_space<vmem>>, vector<1x32x256xf32>,
    return
  }
  func.func @transform_0(%arg0: i32) -> (i32, i32, i32) {
    %c0_i32 = arith.constant 0 : i32
    %c0_i32_0 = arith.constant 0 : i32
    %c0_i32_1 = arith.constant 0 : i32
    return %arg0, %c0_i32, %c0_i32_0 : i32, i32, i32
  }
  func.func @transform_1(%arg0: i32) -> (i32, i32) {
    %c0_i32 = arith.constant 0 : i32
    %c0_i32_0 = arith.constant 0 : i32
    %c0_i32_1 = arith.constant 0 : i32
    return %c0_i32, %c0_i32_0 : i32, i32
  }
  func.func @transform_2(%arg0: i32) -> (i32, i32) {
    %c0_i32 = arith.constant 0 : i32
    %c0_i32_0 = arith.constant 0 : i32
    %c0_i32_1 = arith.constant 0 : i32
    return %c0_i32, %c0_i32_0 : i32, i32
  }
  func.func @transform_3(%arg0: i32) -> (i32, i32, i32) {
    %c0_i32 = arith.constant 0 : i32
    %c0_i32_0 = arith.constant 0 : i32
    %c0_i32_1 = arith.constant 0 : i32
    return %arg0, %c0_i32, %c0_i32_0 : i32, i32, i32
  }
}

</mosaic_0001>

<llo_original>
// kernel: tpu_custom_call.1
$region0: #{tpu_custom_call.1}
  #allocation0 [shape = 'u32[]', space=smem, size = 0x4, offset = 0x4, fixed_abs, tag = 'smem constant byte address 0x4 - core index']
  #allocation1 [shape = 'u32[144,128]{1,0:T(1,128)}', space=vmem, size = 0x12000, scoped, tag = 'internal scratch']
  %s0 = inlined_call_operand.hbm [shape: f32[2,32,256], index: 0, kind: input, shape index: {}]
  %s1 = inlined_call_operand.vmem [shape: f32[2,32], index: 1, kind: input, shape index: {}]
  %s2 = inlined_call_operand.vmem [shape: f32[32,2], index: 2, kind: input, shape index: {}]
  %s3 = inlined_call_operand.hbm [shape: f32[2,32,256], index: 3, kind: output, shape index: {}]
  %s4 = sld [smem:[#allocation0]]
  $region26: #{tpu_custom_call.1} parent=0
    _
  %s6 = ssub.s32 1, %s4
  %s7 = scalar_select 0, %s6, %s4
  $region1: #{tpu_custom_call.1} parent=0
    #allocation2 [shape = 'u8[65536]{0}', space=vmem, size = 0x10000, scoped, tag = 'input window, operand 0, single buffered']
    #allocation3 [shape = 's32[1]{0}', space=sflag, size = 0x4, scoped, tag = 'scoped memory for tpu_custom_call.1']
    #allocation4 [shape = 's32[1]{0}', space=sflag, size = 0x4, scoped, tag = 'scoped memory for tpu_custom_call.1']
    #allocation5 [shape = 'u8[65536]{0}', space=vmem, size = 0x10000, scoped, tag = 'output window, operand 0, single buffered']
    %8 = vsyncpa [#allocation3], 0
    %9 = vsyncpa [#allocation4], 0
    // Predicated region
    $region2: #{tpu_custom_call.1} parent=1 // pred_check
      _
    $region3: #{tpu_custom_call.1} parent=1 // pred_check_branch
      %11 = sbr.rel (0) target = $region5
    $region4: #{tpu_custom_call.1} parent=1 // pred_region
      %s13 = ssub.s32 2048, 2048
      %14 = vsyncadd [#allocation3], %s13
      %s15 = sshll.u32 [#allocation2], 4
      %s16 = int_to_ptr.vmem [resolvable:$true] %s15
      %21 = dma.hbm_to_vmem [thread:$0]  %s0, 2048, %s16, [#allocation3], 256, 256, 16
    $region5: #{tpu_custom_call.1} parent=1 // pred_fallthru
      _
    // Predicated region
    $region6: #{tpu_custom_call.1} parent=1 // pred_check
      _
    $region7: #{tpu_custom_call.1} parent=1 // pred_check_branch
      %23 = sbr.rel (0) target = $region9
    $region8: #{tpu_custom_call.1} parent=1 // pred_region
      _
    $region9: #{tpu_custom_call.1} parent=1 // pred_fallthru
      _
    // Predicated region
    $region10: #{tpu_custom_call.1} parent=1 // pred_check
      _
    $region11: #{tpu_custom_call.1} parent=1 // pred_check_branch
      %25 = sbr.rel (0) target = $region13
    $region12: #{tpu_custom_call.1} parent=1 // pred_region
      _
    $region13: #{tpu_custom_call.1} parent=1 // pred_fallthru
      _
    // Predicated region
    $region14: #{tpu_custom_call.1} parent=1 // pred_check
      _
    $region15: #{tpu_custom_call.1} parent=1 // pred_check_branch
      %27 = sbr.rel (0) target = $region17
    $region16: #{tpu_custom_call.1} parent=1 // pred_region
      %28 = dma.done [#allocation3], 2048
    $region17: #{tpu_custom_call.1} parent=1 // pred_fallthru
      _
    %v29 = vld [vmem:[%s1] sm:$0x3]
    %v30 = vld [vmem:[%s2] sm:$0xff]
    %v31 = vld [vmem:[%s2 + $0x8] sm:$0xff]
    %v32 = vld [vmem:[%s2 + $0x10] sm:$0xff]
    %v33 = vld [vmem:[%s2 + $0x18] sm:$0xff]
    %v34 = vld [vmem:[#allocation2] sm:$0xff]
    %v35 = vld [vmem:[#allocation2 + $0x8] sm:$0xff]
    %v36 = vld [vmem:[#allocation2 + $0x10] sm:$0xff]
    %v37 = vld [vmem:[#allocation2 + $0x18] sm:$0xff]
    %v38 = vld [vmem:[#allocation2 + $0x20] sm:$0xff]
    %v39 = vld [vmem:[#allocation2 + $0x28] sm:$0xff]
    %v40 = vld [vmem:[#allocation2 + $0x30] sm:$0xff]
    %v41 = vld [vmem:[#allocation2 + $0x38] sm:$0xff]
    %v42 = vadd.f32 %v34, %v35
    %43 = vadd.xlane.f32.xlu0 %v42
    %v44 = vpop.xlane.xlu0 %43
    %v45 = vadd.f32 %v36, %v37
    %46 = vadd.xlane.f32.xlu0 %v45
    %v47 = vpop.xlane.xlu0 %46
    %v48 = vadd.f32 %v38, %v39
    %49 = vadd.xlane.f32.xlu0 %v48
    %v50 = vpop.xlane.xlu0 %49
    %v51 = vadd.f32 %v40, %v41
    %52 = vadd.xlane.f32.xlu0 %v51
    %v53 = vpop.xlane.xlu0 %52
    %v54 = vmax.f32 %v34, %v35
    %55 = vmax.xlane.f32.xlu0 %v54
    %v56 = vpop.xlane.xlu0 %55
    %v57 = vmax.f32 %v36, %v37
    %58 = vmax.xlane.f32.xlu0 %v57
    %v59 = vpop.xlane.xlu0 %58
    %v60 = vmax.f32 %v38, %v39
    %61 = vmax.xlane.f32.xlu0 %v60
    %v62 = vpop.xlane.xlu0 %61
    %v63 = vmax.f32 %v40, %v41
    %64 = vmax.xlane.f32.xlu0 %v63
    %v65 = vpop.xlane.xlu0 %64
    %v66 = vmul.f32 %v44, 0.00390625
    %v67 = vmul.f32 %v47, 0.00390625
    %v68 = vmul.f32 %v50, 0.00390625
    %v69 = vmul.f32 %v53, 0.00390625
    %vm70 = vcmask 7168
    %v71 = vsel %vm70, %v66, %v56
    %v72 = vsel %vm70, %v67, %v59
    %v73 = vsel %vm70, %v68, %v62
    %v74 = vsel %vm70, %v69, %v65
    %vm75 = vcmask 261120
    %v77 = vsel %vm75, %v29, 0
    %79 = vmatprep.subr.mxu0 0.0
    %80 = vmatpush1.msra.mxu0 %v71
    %81 = vmatprep.subr.mxu0 0.0
    %82 = vmatpush1.msra.mxu0 %v72
    %83 = vmatprep.subr.mxu0 0.0
    %84 = vmatpush1.msra.mxu0 %v73
    %85 = vmatprep.subr.mxu0 0.0
    %86 = vmatpush1.msra.mxu0 %v74
    %87 = vmatprep.subr.mxu0 0.0
    %88 = vmatpush1.msra.mxu0 0.0
    %89 = vmatprep.subr.mxu0 0.0
    %90 = vmatpush1.msra.mxu0 0.0
    %91 = vmatprep.subr.mxu0 0.0
    %92 = vmatpush1.msra.mxu0 0.0
    %93 = vmatprep.subr.mxu0 0.0
    %94 = vmatpush1.msra.mxu0 0.0
    %95 = vmatprep.subr.mxu0 0.0
    %96 = vmatpush1.msra.mxu0 0.0
    %97 = vmatprep.subr.mxu0 0.0
    %98 = vmatpush1.msra.mxu0 0.0
    %99 = vmatprep.subr.mxu0 0.0
    %100 = vmatpush1.msra.mxu0 0.0
    %101 = vmatprep.subr.mxu0 0.0
    %102 = vmatpush1.msra.mxu0 0.0
    %103 = vmatprep.subr.mxu0 0.0
    %104 = vmatpush1.msra.mxu0 0.0
    %105 = vmatprep.subr.mxu0 0.0
    %106 = vmatpush1.msra.mxu0 0.0
    %107 = vmatprep.subr.mxu0 0.0
    %108 = vmatpush1.msra.mxu0 0.0
    %109 = vmatprep.subr.mxu0 0.0
    %110 = vmatpush1.msra.mxu0 0.0
    %111 = vmatprep.subr.mxu0 0.0
    %112 = vmatpush1.msra.mxu0 0.0
    %113 = vmatprep.subr.mxu0 0.0
    %114 = vmatpush1.msra.mxu0 0.0
    %115 = vmatprep.subr.mxu0 0.0
    %116 = vmatpush1.msra.mxu0 0.0
    %117 = vmatprep.subr.mxu0 0.0
    %118 = vmatpush1.msra.mxu0 0.0
    %119 = vmatprep.subr.mxu0 0.0
    %120 = vmatpush1.msra.mxu0 0.0
    %121 = vmatprep.subr.mxu0 0.0
    %122 = vmatpush1.msra.mxu0 0.0
    %123 = vmatprep.subr.mxu0 0.0
    %124 = vmatpush1.msra.mxu0 0.0
    %125 = vmatprep.subr.mxu0 0.0
    %126 = vmatpush1.msra.mxu0 0.0
    %127 = vmatprep.subr.mxu0 0.0
    %128 = vmatpush1.msra.mxu0 0.0
    %129 = vmatprep.subr.mxu0 0.0
    %130 = vmatpush1.msra.mxu0 0.0
    %131 = vmatprep.subr.mxu0 0.0
    %132 = vmatpush1.msra.mxu0 0.0
    %133 = vmatprep.subr.mxu0 0.0
    %134 = vmatpush1.msra.mxu0 0.0
    %135 = vmatprep.subr.mxu0 0.0
    %136 = vmatpush1.msra.mxu0 0.0
    %137 = vmatprep.subr.mxu0 0.0
    %138 = vmatpush1.msra.mxu0 0.0
    %139 = vmatprep.subr.mxu0 0.0
    %140 = vmatpush1.msra.mxu0 0.0
    %141 = vmatprep.subr.mxu0 0.0
    %142 = vmatpush1.msra.mxu0 0.0
    %143 = vmatprep.mubr.f32.mxu0 0.0
    %144 = vmatmul.mubr.f32.gmra.mrb[0].mxu0 %v77
    %v145 = vpop.f32.mrb[0].mxu0
    %v146 = vadd.f32 0.0, %v145
    %v147 = vpop.f32.mrb[0].mxu0
    %148 = vdwg.mxu0
    %v149 = vmax.f32 %v146, 0.0
    %vm150 = vcmask 15360
    %v152 = vsel %vm150, %v30, 0
    %v155 = vsel %vm150, %v31, 0
    %v158 = vsel %vm150, %v32, 0
    %v161 = vsel %vm150, %v33, 0
    %vm163 = vcmask 1041408
    %v165 = vsel %vm163, %v149, 0
    %167 = vmatprep.subr.mxu0 0.0
    %168 = vmatpush1.msra.mxu0 %v165
    %169 = vmatprep.subr.mxu0 0.0
    %170 = vmatpush1.msra.mxu0 0.0
    %171 = vmatprep.subr.mxu0 0.0
    %172 = vmatpush1.msra.mxu0 0.0
    %173 = vmatprep.subr.mxu0 0.0
    %174 = vmatpush1.msra.mxu0 0.0
    %175 = vmatprep.subr.mxu0 0.0
    %176 = vmatpush1.msra.mxu0 0.0
    %177 = vmatprep.subr.mxu0 0.0
    %178 = vmatpush1.msra.mxu0 0.0
    %179 = vmatprep.subr.mxu0 0.0
    %180 = vmatpush1.msra.mxu0 0.0
    %181 = vmatprep.subr.mxu0 0.0
    %182 = vmatpush1.msra.mxu0 0.0
    %183 = vmatprep.subr.mxu0 0.0
    %184 = vmatpush1.msra.mxu0 0.0
    %185 = vmatprep.subr.mxu0 0.0
    %186 = vmatpush1.msra.mxu0 0.0
    %187 = vmatprep.subr.mxu0 0.0
    %188 = vmatpush1.msra.mxu0 0.0
    %189 = vmatprep.subr.mxu0 0.0
    %190 = vmatpush1.msra.mxu0 0.0
    %191 = vmatprep.subr.mxu0 0.0
    %192 = vmatpush1.msra.mxu0 0.0
    %193 = vmatprep.subr.mxu0 0.0
    %194 = vmatpush1.msra.mxu0 0.0
    %195 = vmatprep.subr.mxu0 0.0
    %196 = vmatpush1.msra.mxu0 0.0
    %197 = vmatprep.subr.mxu0 0.0
    %198 = vmatpush1.msra.mxu0 0.0
    %199 = vmatprep.subr.mxu0 0.0
    %200 = vmatpush1.msra.mxu0 0.0
    %201 = vmatprep.subr.mxu0 0.0
    %202 = vmatpush1.msra.mxu0 0.0
    %203 = vmatprep.subr.mxu0 0.0
    %204 = vmatpush1.msra.mxu0 0.0
    %205 = vmatprep.subr.mxu0 0.0
    %206 = vmatpush1.msra.mxu0 0.0
    %207 = vmatprep.subr.mxu0 0.0
    %208 = vmatpush1.msra.mxu0 0.0
    %209 = vmatprep.subr.mxu0 0.0
    %210 = vmatpush1.msra.mxu0 0.0
    %211 = vmatprep.subr.mxu0 0.0
    %212 = vmatpush1.msra.mxu0 0.0
    %213 = vmatprep.subr.mxu0 0.0
    %214 = vmatpush1.msra.mxu0 0.0
    %215 = vmatprep.subr.mxu0 0.0
    %216 = vmatpush1.msra.mxu0 0.0
    %217 = vmatprep.subr.mxu0 0.0
    %218 = vmatpush1.msra.mxu0 0.0
    %219 = vmatprep.subr.mxu0 0.0
    %220 = vmatpush1.msra.mxu0 0.0
    %221 = vmatprep.subr.mxu0 0.0
    %222 = vmatpush1.msra.mxu0 0.0
    %223 = vmatprep.subr.mxu0 0.0
    %224 = vmatpush1.msra.mxu0 0.0
    %225 = vmatprep.subr.mxu0 0.0
    %226 = vmatpush1.msra.mxu0 0.0
    %227 = vmatprep.subr.mxu0 0.0
    %228 = vmatpush1.msra.mxu0 0.0
    %229 = vmatprep.subr.mxu0 0.0
    %230 = vmatpush1.msra.mxu0 0.0
    %231 = vmatprep.mubr.f32.mxu0 0.0
    %232 = vmatmul.mubr.f32.gmra.mrb[0].mxu0 %v152
    %v233 = vpop.f32.mrb[0].mxu0
    %v234 = vadd.f32 0.0, %v233
    %v235 = vpop.f32.mrb[0].mxu0
    %236 = vmatprep.mubr.f32.mxu0 0.0
    %237 = vmatmul.mubr.f32.gmra.mrb[0].mxu0 %v155
    %v238 = vpop.f32.mrb[0].mxu0
    %v239 = vadd.f32 0.0, %v238
    %v240 = vpop.f32.mrb[0].mxu0
    %241 = vmatprep.mubr.f32.mxu0 0.0
    %242 = vmatmul.mubr.f32.gmra.mrb[0].mxu0 %v158
    %v243 = vpop.f32.mrb[0].mxu0
    %v244 = vadd.f32 0.0, %v243
    %v245 = vpop.f32.mrb[0].mxu0
    %246 = vmatprep.mubr.f32.mxu0 0.0
    %247 = vmatmul.mubr.f32.gmra.mrb[0].mxu0 %v161
    %v248 = vpop.f32.mrb[0].mxu0
    %v249 = vadd.f32 0.0, %v248
    %v250 = vpop.f32.mrb[0].mxu0
    %251 = vdwg.mxu0
    %256 = vrot.lane.b32.xlu0 %v234, 127
    %v257 = vpop.permute.xlu0 %256
    %258 = vrot.lane.b32.xlu0 %v239, 127
    %v259 = vpop.permute.xlu0 %258
    %260 = vrot.lane.b32.xlu0 %v244, 127
    %v261 = vpop.permute.xlu0 %260
    %262 = vrot.lane.b32.xlu0 %v249, 127
    %v263 = vpop.permute.xlu0 %262
    %v268 = vadd.f32 %v234, %v257
    %v269 = vadd.f32 %v239, %v259
    %v270 = vadd.f32 %v244, %v261
    %v271 = vadd.f32 %v249, %v263
    %v272 = vxor.u32 %v268, 2147483648
    %v273 = vxor.u32 %v269, 2147483648
    %v274 = vxor.u32 %v270, 2147483648
    %v275 = vxor.u32 %v271, 2147483648
    %v276 = vmul.f32 %v272, 1.442695
    %v277 = vpow.pop %v276
    %v278 = vmul.f32 %v273, 1.442695
    %v279 = vpow.pop %v278
    %v280 = vmul.f32 %v274, 1.442695
    %v281 = vpow.pop %v280
    %v282 = vmul.f32 %v275, 1.442695
    %v283 = vpow.pop %v282
    %v284 = vadd.f32 %v277, 1.0
    %v285 = vadd.f32 %v279, 1.0
    %v286 = vadd.f32 %v281, 1.0
    %v287 = vadd.f32 %v283, 1.0
    %v288 = vrcp.pop %v284
    %v289 = vmul.f32 1.0, %v288
    %v290 = vrcp.pop %v285
    %v291 = vmul.f32 1.0, %v290
    %v292 = vrcp.pop %v286
    %v293 = vmul.f32 1.0, %v292
    %v294 = vrcp.pop %v287
    %v295 = vmul.f32 1.0, %v294
    %297 = vset.pattern.permute.xlu0 0
    %298 = vperm.xlu0 %297, %v289
    %v299 = vpop.permute.xlu0 %298
    %302 = vset.pattern.permute.xlu0 0
    %303 = vperm.xlu0 %302, %v291
    %v304 = vpop.permute.xlu0 %303
    %307 = vset.pattern.permute.xlu0 0
    %308 = vperm.xlu0 %307, %v293
    %v309 = vpop.permute.xlu0 %308
    %312 = vset.pattern.permute.xlu0 0
    %313 = vperm.xlu0 %312, %v295
    %v314 = vpop.permute.xlu0 %313
    %v316 = vmul.f32 %v34, %v299
    %v317 = vmul.f32 %v35, %v299
    %v318 = vmul.f32 %v36, %v304
    %v319 = vmul.f32 %v37, %v304
    %v320 = vmul.f32 %v38, %v309
    %v321 = vmul.f32 %v39, %v309
    %v322 = vmul.f32 %v40, %v314
    %v323 = vmul.f32 %v41, %v314
    %324 = vst [vmem:[#allocation5] sm:$0xff] %v316
    %325 = vst [vmem:[#allocation5 + $0x8] sm:$0xff] %v317
    %326 = vst [vmem:[#allocation5 + $0x10] sm:$0xff] %v318
    %327 = vst [vmem:[#allocation5 + $0x18] sm:$0xff] %v319
    %328 = vst [vmem:[#allocation5 + $0x20] sm:$0xff] %v320
    %329 = vst [vmem:[#allocation5 + $0x28] sm:$0xff] %v321
    %330 = vst [vmem:[#allocation5 + $0x30] sm:$0xff] %v322
    %331 = vst [vmem:[#allocation5 + $0x38] sm:$0xff] %v323
    %s332 = scalar_lea.vmem [#allocation2], 64
    %v333 = vld [vmem:[%s332] sm:$0xff]
    %v334 = vld [vmem:[%s332 + $0x8] sm:$0xff]
    %v335 = vld [vmem:[%s332 + $0x10] sm:$0xff]
    %v336 = vld [vmem:[%s332 + $0x18] sm:$0xff]
    %v337 = vld [vmem:[%s332 + $0x20] sm:$0xff]
    %v338 = vld [vmem:[%s332 + $0x28] sm:$0xff]
    %v339 = vld [vmem:[%s332 + $0x30] sm:$0xff]
    %v340 = vld [vmem:[%s332 + $0x38] sm:$0xff]
    %v341 = vadd.f32 %v333, %v334
    %342 = vadd.xlane.f32.xlu0 %v341
    %v343 = vpop.xlane.xlu0 %342
    %v344 = vadd.f32 %v335, %v336
    %345 = vadd.xlane.f32.xlu0 %v344
    %v346 = vpop.xlane.xlu0 %345
    %v347 = vadd.f32 %v337, %v338
    %348 = vadd.xlane.f32.xlu0 %v347
    %v349 = vpop.xlane.xlu0 %348
    %v350 = vadd.f32 %v339, %v340
    %351 = vadd.xlane.f32.xlu0 %v350
    %v352 = vpop.xlane.xlu0 %351
    %v353 = vmax.f32 %v333, %v334
    %354 = vmax.xlane.f32.xlu0 %v353
    %v355 = vpop.xlane.xlu0 %354
    %v356 = vmax.f32 %v335, %v336
    %357 = vmax.xlane.f32.xlu0 %v356
    %v358 = vpop.xlane.xlu0 %357
    %v359 = vmax.f32 %v337, %v338
    %360 = vmax.xlane.f32.xlu0 %v359
    %v361 = vpop.xlane.xlu0 %360
    %v362 = vmax.f32 %v339, %v340
    %363 = vmax.xlane.f32.xlu0 %v362
    %v364 = vpop.xlane.xlu0 %363
    %v365 = vmul.f32 %v343, 0.00390625
    %v366 = vmul.f32 %v346, 0.00390625
    %v367 = vmul.f32 %v349, 0.00390625
    %v368 = vmul.f32 %v352, 0.00390625
    %v369 = vsel %vm70, %v365, %v355
    %v370 = vsel %vm70, %v366, %v358
    %v371 = vsel %vm70, %v367, %v361
    %v372 = vsel %vm70, %v368, %v364
    %373 = vmatprep.subr.mxu0 0.0
    %374 = vmatpush1.msra.mxu0 %v369
    %375 = vmatprep.subr.mxu0 0.0
    %376 = vmatpush1.msra.mxu0 %v370
    %377 = vmatprep.subr.mxu0 0.0
    %378 = vmatpush1.msra.mxu0 %v371
    %379 = vmatprep.subr.mxu0 0.0
    %380 = vmatpush1.msra.mxu0 %v372
    %381 = vmatprep.subr.mxu0 0.0
    %382 = vmatpush1.msra.mxu0 0.0
    %383 = vmatprep.subr.mxu0 0.0
    %384 = vmatpush1.msra.mxu0 0.0
    %385 = vmatprep.subr.mxu0 0.0
    %386 = vmatpush1.msra.mxu0 0.0
    %387 = vmatprep.subr.mxu0 0.0
    %388 = vmatpush1.msra.mxu0 0.0
    %389 = vmatprep.subr.mxu0 0.0
    %390 = vmatpush1.msra.mxu0 0.0
    %391 = vmatprep.subr.mxu0 0.0
    %392 = vmatpush1.msra.mxu0 0.0
    %393 = vmatprep.subr.mxu0 0.0
    %394 = vmatpush1.msra.mxu0 0.0
    %395 = vmatprep.subr.mxu0 0.0
    %396 = vmatpush1.msra.mxu0 0.0
    %397 = vmatprep.subr.mxu0 0.0
    %398 = vmatpush1.msra.mxu0 0.0
    %399 = vmatprep.subr.mxu0 0.0
    %400 = vmatpush1.msra.mxu0 0.0
    %401 = vmatprep.subr.mxu0 0.0
    %402 = vmatpush1.msra.mxu0 0.0
    %403 = vmatprep.subr.mxu0 0.0
    %404 = vmatpush1.msra.mxu0 0.0
    %405 = vmatprep.subr.mxu0 0.0
    %406 = vmatpush1.msra.mxu0 0.0
    %407 = vmatprep.subr.mxu0 0.0
    %408 = vmatpush1.msra.mxu0 0.0
    %409 = vmatprep.subr.mxu0 0.0
    %410 = vmatpush1.msra.mxu0 0.0
    %411 = vmatprep.subr.mxu0 0.0
    %412 = vmatpush1.msra.mxu0 0.0
    %413 = vmatprep.subr.mxu0 0.0
    %414 = vmatpush1.msra.mxu0 0.0
    %415 = vmatprep.subr.mxu0 0.0
    %416 = vmatpush1.msra.mxu0 0.0
    %417 = vmatprep.subr.mxu0 0.0
    %418 = vmatpush1.msra.mxu0 0.0
    %419 = vmatprep.subr.mxu0 0.0
    %420 = vmatpush1.msra.mxu0 0.0
    %421 = vmatprep.subr.mxu0 0.0
    %422 = vmatpush1.msra.mxu0 0.0
    %423 = vmatprep.subr.mxu0 0.0
    %424 = vmatpush1.msra.mxu0 0.0
    %425 = vmatprep.subr.mxu0 0.0
    %426 = vmatpush1.msra.mxu0 0.0
    %427 = vmatprep.subr.mxu0 0.0
    %428 = vmatpush1.msra.mxu0 0.0
    %429 = vmatprep.subr.mxu0 0.0
    %430 = vmatpush1.msra.mxu0 0.0
    %431 = vmatprep.subr.mxu0 0.0
    %432 = vmatpush1.msra.mxu0 0.0
    %433 = vmatprep.subr.mxu0 0.0
    %434 = vmatpush1.msra.mxu0 0.0
    %435 = vmatprep.subr.mxu0 0.0
    %436 = vmatpush1.msra.mxu0 0.0
    %437 = vmatprep.mubr.f32.mxu0 0.0
    %438 = vmatmul.mubr.f32.gmra.mrb[0].mxu0 %v77
    %v439 = vpop.f32.mrb[0].mxu0
    %v440 = vadd.f32 0.0, %v439
    %v441 = vpop.f32.mrb[0].mxu0
    %442 = vdwg.mxu0
    %v443 = vmax.f32 %v440, 0.0
    %v445 = vsel %vm163, %v443, 0
    %447 = vmatprep.subr.mxu0 0.0
    %448 = vmatpush1.msra.mxu0 %v445
    %449 = vmatprep.subr.mxu0 0.0
    %450 = vmatpush1.msra.mxu0 0.0
    %451 = vmatprep.subr.mxu0 0.0
    %452 = vmatpush1.msra.mxu0 0.0
    %453 = vmatprep.subr.mxu0 0.0
    %454 = vmatpush1.msra.mxu0 0.0
    %455 = vmatprep.subr.mxu0 0.0
    %456 = vmatpush1.msra.mxu0 0.0
    %457 = vmatprep.subr.mxu0 0.0
    %458 = vmatpush1.msra.mxu0 0.0
    %459 = vmatprep.subr.mxu0 0.0
    %460 = vmatpush1.msra.mxu0 0.0
    %461 = vmatprep.subr.mxu0 0.0
    %462 = vmatpush1.msra.mxu0 0.0
    %463 = vmatprep.subr.mxu0 0.0
    %464 = vmatpush1.msra.mxu0 0.0
    %465 = vmatprep.subr.mxu0 0.0
    %466 = vmatpush1.msra.mxu0 0.0
    %467 = vmatprep.subr.mxu0 0.0
    %468 = vmatpush1.msra.mxu0 0.0
    %469 = vmatprep.subr.mxu0 0.0
    %470 = vmatpush1.msra.mxu0 0.0
    %471 = vmatprep.subr.mxu0 0.0
    %472 = vmatpush1.msra.mxu0 0.0
    %473 = vmatprep.subr.mxu0 0.0
    %474 = vmatpush1.msra.mxu0 0.0
    %475 = vmatprep.subr.mxu0 0.0
    %476 = vmatpush1.msra.mxu0 0.0
    %477 = vmatprep.subr.mxu0 0.0
    %478 = vmatpush1.msra.mxu0 0.0
    %479 = vmatprep.subr.mxu0 0.0
    %480 = vmatpush1.msra.mxu0 0.0
    %481 = vmatprep.subr.mxu0 0.0
    %482 = vmatpush1.msra.mxu0 0.0
    %483 = vmatprep.subr.mxu0 0.0
    %484 = vmatpush1.msra.mxu0 0.0
    %485 = vmatprep.subr.mxu0 0.0
    %486 = vmatpush1.msra.mxu0 0.0
    %487 = vmatprep.subr.mxu0 0.0
    %488 = vmatpush1.msra.mxu0 0.0
    %489 = vmatprep.subr.mxu0 0.0
    %490 = vmatpush1.msra.mxu0 0.0
    %491 = vmatprep.subr.mxu0 0.0
    %492 = vmatpush1.msra.mxu0 0.0
    %493 = vmatprep.subr.mxu0 0.0
    %494 = vmatpush1.msra.mxu0 0.0
    %495 = vmatprep.subr.mxu0 0.0
    %496 = vmatpush1.msra.mxu0 0.0
    %497 = vmatprep.subr.mxu0 0.0
    %498 = vmatpush1.msra.mxu0 0.0
    %499 = vmatprep.subr.mxu0 0.0
    %500 = vmatpush1.msra.mxu0 0.0
    %501 = vmatprep.subr.mxu0 0.0
    %502 = vmatpush1.msra.mxu0 0.0
    %503 = vmatprep.subr.mxu0 0.0
    %504 = vmatpush1.msra.mxu0 0.0
    %505 = vmatprep.subr.mxu0 0.0
    %506 = vmatpush1.msra.mxu0 0.0
    %507 = vmatprep.subr.mxu0 0.0
    %508 = vmatpush1.msra.mxu0 0.0
    %509 = vmatprep.subr.mxu0 0.0
    %510 = vmatpush1.msra.mxu0 0.0
    %511 = vmatprep.mubr.f32.mxu0 0.0
    %512 = vmatmul.mubr.f32.gmra.mrb[0].mxu0 %v152
    %v513 = vpop.f32.mrb[0].mxu0
    %v514 = vadd.f32 0.0, %v513
    %v515 = vpop.f32.mrb[0].mxu0
    %516 = vmatprep.mubr.f32.mxu0 0.0
    %517 = vmatmul.mubr.f32.gmra.mrb[0].mxu0 %v155
    %v518 = vpop.f32.mrb[0].mxu0
    %v519 = vadd.f32 0.0, %v518
    %v520 = vpop.f32.mrb[0].mxu0
    %521 = vmatprep.mubr.f32.mxu0 0.0
    %522 = vmatmul.mubr.f32.gmra.mrb[0].mxu0 %v158
    %v523 = vpop.f32.mrb[0].mxu0
    %v524 = vadd.f32 0.0, %v523
    %v525 = vpop.f32.mrb[0].mxu0
    %526 = vmatprep.mubr.f32.mxu0 0.0
    %527 = vmatmul.mubr.f32.gmra.mrb[0].mxu0 %v161
    %v528 = vpop.f32.mrb[0].mxu0
    %v529 = vadd.f32 0.0, %v528
    %v530 = vpop.f32.mrb[0].mxu0
    %531 = vdwg.mxu0
    %536 = vrot.lane.b32.xlu0 %v514, 127
    %v537 = vpop.permute.xlu0 %536
    %538 = vrot.lane.b32.xlu0 %v519, 127
    %v539 = vpop.permute.xlu0 %538
    %540 = vrot.lane.b32.xlu0 %v524, 127
    %v541 = vpop.permute.xlu0 %540
    %542 = vrot.lane.b32.xlu0 %v529, 127
    %v543 = vpop.permute.xlu0 %542
    %v548 = vadd.f32 %v514, %v537
    %v549 = vadd.f32 %v519, %v539
    %v550 = vadd.f32 %v524, %v541
    %v551 = vadd.f32 %v529, %v543
    %v552 = vxor.u32 %v548, 2147483648
    %v553 = vxor.u32 %v549, 2147483648
    %v554 = vxor.u32 %v550, 2147483648
    %v555 = vxor.u32 %v551, 2147483648
    %v556 = vmul.f32 %v552, 1.442695
    %v557 = vpow.pop %v556
    %v558 = vmul.f32 %v553, 1.442695
    %v559 = vpow.pop %v558
    %v560 = vmul.f32 %v554, 1.442695
    %v561 = vpow.pop %v560
    %v562 = vmul.f32 %v555, 1.442695
    %v563 = vpow.pop %v562
    %v564 = vadd.f32 %v557, 1.0
    %v565 = vadd.f32 %v559, 1.0
    %v566 = vadd.f32 %v561, 1.0
    %v567 = vadd.f32 %v563, 1.0
    %v568 = vrcp.pop %v564
    %v569 = vmul.f32 1.0, %v568
    %v570 = vrcp.pop %v565
    %v571 = vmul.f32 1.0, %v570
    %v572 = vrcp.pop %v566
    %v573 = vmul.f32 1.0, %v572
    %v574 = vrcp.pop %v567
    %v575 = vmul.f32 1.0, %v574
    %577 = vset.pattern.permute.xlu0 0
    %578 = vperm.xlu0 %577, %v569
    %v579 = vpop.permute.xlu0 %578
    %582 = vset.pattern.permute.xlu0 0
    %583 = vperm.xlu0 %582, %v571
    %v584 = vpop.permute.xlu0 %583
    %587 = vset.pattern.permute.xlu0 0
    %588 = vperm.xlu0 %587, %v573
    %v589 = vpop.permute.xlu0 %588
    %592 = vset.pattern.permute.xlu0 0
    %593 = vperm.xlu0 %592, %v575
    %v594 = vpop.permute.xlu0 %593
    %v596 = vmul.f32 %v333, %v579
    %v597 = vmul.f32 %v334, %v579
    %v598 = vmul.f32 %v335, %v584
    %v599 = vmul.f32 %v336, %v584
    %v600 = vmul.f32 %v337, %v589
    %v601 = vmul.f32 %v338, %v589
    %v602 = vmul.f32 %v339, %v594
    %v603 = vmul.f32 %v340, %v594
    %s604 = scalar_lea.vmem [#allocation5], 64
    %605 = vst [vmem:[%s604] sm:$0xff] %v596
    %606 = vst [vmem:[%s604 + $0x8] sm:$0xff] %v597
    %607 = vst [vmem:[%s604 + $0x10] sm:$0xff] %v598
    %608 = vst [vmem:[%s604 + $0x18] sm:$0xff] %v599
    %609 = vst [vmem:[%s604 + $0x20] sm:$0xff] %v600
    %610 = vst [vmem:[%s604 + $0x28] sm:$0xff] %v601
    %611 = vst [vmem:[%s604 + $0x30] sm:$0xff] %v602
    %612 = vst [vmem:[%s604 + $0x38] sm:$0xff] %v603
    // Predicated region
    $region18: #{tpu_custom_call.1} parent=1 // pred_check
      _
    $region19: #{tpu_custom_call.1} parent=1 // pred_check_branch
      %614 = sbr.rel (0) target = $region21
    $region20: #{tpu_custom_call.1} parent=1 // pred_region
      %s616 = ssub.s32 2048, 2048
      %617 = vsyncadd [#allocation4], %s616
      %s618 = sshll.u32 [#allocation5], 4
      %s619 = int_to_ptr.vmem [resolvable:$true] %s618
      %624 = dma.vmem_to_hbm [thread:$0]  %s619, 2048, %s3, [#allocation4], 256, 256, 16
    $region21: #{tpu_custom_call.1} parent=1 // pred_fallthru
      _
    // Predicated region
    $region22: #{tpu_custom_call.1} parent=1 // pred_check
      _
    $region23: #{tpu_custom_call.1} parent=1 // pred_check_branch
      %626 = sbr.rel (0) target = $region25
    $region24: #{tpu_custom_call.1} parent=1 // pred_region
      %627 = dma.done [#allocation4], 2048
    $region25: #{tpu_custom_call.1} parent=1 // pred_fallthru
      _
    %628 = vsyncpa [#allocation3], 1
    %629 = vsyncpa [#allocation4], 1

</llo_original>
